<compile_context>
chip_gen: v6e
topology: v6e:2x2x1
jax: 0.10.0
libtpu: 0.0.40
codegen_flags: <defaults>
</compile_context>

<pallas_src>
import functools

import jax
import jax.numpy as jnp
from jax import lax
from jax.experimental import pallas as pl
from jax.experimental.pallas import tpu as pltpu


def _clip_loss_kernel(scale_ref, img_ref, txt_ref, out_ref):
    """One row-tile of both logit matrices.

    scale_ref : (1, 1) f32 in SMEM
    img_ref   : (N, D)  resident VMEM block (caller dtype)
    txt_ref   : (N, D)  resident VMEM block (caller dtype)
    out_ref   : (TQ, 1) f32 per-row loss contributions for this tile
    """
    tq = out_ref.shape[0]
    i = pl.program_id(0)
    scale = scale_ref[0, 0]

    row_start = pl.multiple_of(i * tq, 8)
    rows = pl.ds(row_start, tq)

    img_t = img_ref[rows, :]                     # (TQ, D), caller dtype
    txt_t = txt_ref[rows, :]                     # (TQ, D), caller dtype

    # Fold logit_scale into the small (TQ, D) operands (scale in f32, keep the
    # matmul operands in the caller's dtype so bf16 runs at native MXU rate).
    img_t_s = (img_t.astype(jnp.float32) * scale).astype(img_ref.dtype)
    txt_t_s = (txt_t.astype(jnp.float32) * scale).astype(txt_ref.dtype)

    # NT contraction (no materialized transpose), f32 accumulation.
    dn = (((1,), (1,)), ((), ()))
    # rows of logits_per_image:  scale * img_t @ txt.T  -> (TQ, N)
    logits_img = lax.dot_general(img_t_s, txt_ref[...], dn,
                                 preferred_element_type=jnp.float32)
    # rows of logits_per_text:   scale * txt_t @ img.T  -> (TQ, N)
    logits_txt = lax.dot_general(txt_t_s, img_ref[...], dn,
                                 preferred_element_type=jnp.float32)

    def row_lse(l):
        m = jnp.max(l, axis=1, keepdims=True)
        return jnp.log(jnp.sum(jnp.exp(l - m), axis=1, keepdims=True)) + m

    lse_i = row_lse(logits_img)                  # (TQ, 1)
    lse_t = row_lse(logits_txt)                  # (TQ, 1)

    # Label (diagonal) logits directly from the features — no N x N mask.
    diag = scale * jnp.sum(img_t.astype(jnp.float32) * txt_t.astype(jnp.float32),
                           axis=-1, keepdims=True)  # (TQ, 1)

    # Per-row contribution: CE_image_row + CE_text_row.
    out_ref[...] = lse_i + lse_t - 2.0 * diag


def _pick_block_rows(n, max_block_rows=256, vmem_budget_bytes=6 * 1024 * 1024):
    """Largest power-of-two row tile (multiple of 8) that divides N and keeps
    ~3 live (TQ, N) f32 tiles under a conservative VMEM budget (fits the
    default scoped limits on v5e/v6e/v7x)."""
    cap = max(8, vmem_budget_bytes // (3 * 4 * n))
    cap = min(cap, max_block_rows)
    for tq in (512, 256, 128, 64, 32, 16, 8):
        if tq <= cap and n % tq == 0:
            return tq
    return n  # small / irregular N: single tile


@functools.partial(jax.jit, static_argnames=("block_rows",))
def clip_loss(image_features, text_features, logit_scale, block_rows=None):
    """Pallas implementation of ClipLoss.forward (output_dict=False)."""
    N, D = image_features.shape
    assert text_features.shape == (N, D)

    tq = block_rows if block_rows is not None else _pick_block_rows(N)
    assert N % tq == 0, "block_rows must divide the batch size"

    scale = jnp.asarray(logit_scale, jnp.float32).reshape(1, 1)

    per_row = pl.pallas_call(
        _clip_loss_kernel,
        out_shape=jax.ShapeDtypeStruct((N, 1), jnp.float32),
        grid=(N // tq,),
        in_specs=[
            pl.BlockSpec(memory_space=pltpu.MemorySpace.SMEM),   # logit_scale
            pl.BlockSpec((N, D), lambda i: (0, 0)),              # image_features (resident)
            pl.BlockSpec((N, D), lambda i: (0, 0)),              # text_features  (resident)
        ],
        out_specs=pl.BlockSpec((tq, 1), lambda i: (i, 0)),
        compiler_params=pltpu.CompilerParams(
            dimension_semantics=("parallel",),
        ),
    )(scale, image_features, text_features)

    # (mean_i CE_image + mean_i CE_text) / 2 — tiny final reduction outside the kernel.
    return jnp.sum(per_row) / (2.0 * N)


def clip_loss_ref(image_features, text_features, logit_scale):
    """Pure-JAX reference mirroring the PyTorch module (f32, high precision)."""
    img = image_features.astype(jnp.float32)
    txt = text_features.astype(jnp.float32)
    logits_i = logit_scale * jnp.dot(img, txt.T, precision=lax.Precision.HIGHEST)
    logits_t = logits_i.T
    n = logits_i.shape[0]
    labels = jnp.arange(n)

    def ce(logits):
        lse = jax.nn.logsumexp(logits, axis=-1)
        correct = logits[jnp.arange(n), labels]
        return jnp.mean(lse - correct)

    return (ce(logits_i) + ce(logits_t)) / 2.0


if __name__ == "__main__":
    key = jax.random.PRNGKey(0)
    k1, k2 = jax.random.split(key)

    # Small but (8, 128)-aligned shapes: contrastive batch 16, embedding dim 128.
    N, D = 16, 128
    image_features = jax.random.normal(k1, (N, D), dtype=jnp.float32)
    text_features = jax.random.normal(k2, (N, D), dtype=jnp.float32)
    # CLIP normalizes features and uses exp(log_logit_scale); emulate deterministically.
    image_features = image_features / jnp.linalg.norm(image_features, axis=-1, keepdims=True)
    text_features = text_features / jnp.linalg.norm(text_features, axis=-1, keepdims=True)
    logit_scale = jnp.float32(14.285714)  # ~ 1 / 0.07

    # f32 path (block_rows=8 -> grid of 2 tiles, exercises the tiled pipeline).
    loss = clip_loss(image_features, text_features, logit_scale, block_rows=8)
    loss = jax.block_until_ready(loss)
    ref = clip_loss_ref(image_features, text_features, logit_scale)
    assert jnp.allclose(loss, ref, atol=5e-4, rtol=1e-4), (loss, ref)

    # bf16 path: features stay bf16 into the MXU (f32 accumulation inside).
    loss_bf16 = clip_loss(image_features.astype(jnp.bfloat16),
                          text_features.astype(jnp.bfloat16),
                          logit_scale, block_rows=8)
    loss_bf16 = jax.block_until_ready(loss_bf16)
    assert jnp.allclose(loss_bf16, ref, atol=5e-2, rtol=5e-2), (loss_bf16, ref)

    print("KERNEL_OK")
</pallas_src>

<mosaic_0001>
module attributes {stable_mosaic.version = 11 : i64} {
  func.func @_clip_loss_kernel(%arg0: i32, %arg1: memref<1x1xf32, #tpu.memory_space<smem>>, %arg2: memref<16x128xf32, #tpu.memory_space<vmem>>, %arg3: memref<16x128xf32, #tpu.memory_space<vmem>>, %arg4: memref<8x1xf32, #tpu.memory_space<vmem>>) attributes {dimension_semantics = [#tpu.dimension_semantics<parallel>], iteration_bounds = array<i64: 2>, scalar_prefetch = 0 : i64, scratch_operands = 0 : i64, tpu.core_type = #tpu.core_type<tc>, window_params = [{transform_indices = @transform_0, window_bounds = array<i64: 1, 1>}, {pipeline_mode = #tpu.pipeline_mode<synchronous>, transform_indices = @transform_1, window_bounds = array<i64: 16, 128>}, {pipeline_mode = #tpu.pipeline_mode<synchronous>, transform_indices = @transform_2, window_bounds = array<i64: 16, 128>}, {transform_indices = @transform_3, window_bounds = array<i64: 8, 1>}]} {
    %c0 = arith.constant 0 : index
    %c0_0 = arith.constant 0 : index
    %0 = memref.load %arg1[%c0, %c0_0] : memref<1x1xf32, #tpu.memory_space<smem>>
    %c8_i32 = arith.constant 8 : i32
    %1 = arith.muli %arg0, %c8_i32 : i32
    %2 = tpu.assume_multiple %1, 8 : i32
    %3 = arith.index_cast %2 : i32 to index
    %c0_1 = arith.constant 0 : index
    %4 = vector.load %arg2[%3, %c0_1] : memref<16x128xf32, #tpu.memory_space<vmem>>, vector<8x128xf32>
    %5 = arith.index_cast %2 : i32 to index
    %c0_2 = arith.constant 0 : index
    %6 = vector.load %arg3[%5, %c0_2] : memref<16x128xf32, #tpu.memory_space<vmem>>, vector<8x128xf32>
    %7 = vector.broadcast %0 : f32 to vector<8x128xf32>
    %8 = arith.mulf %4, %7 : vector<8x128xf32>
    %9 = vector.broadcast %0 : f32 to vector<8x128xf32>
    %10 = arith.mulf %6, %9 : vector<8x128xf32>
    %c0_3 = arith.constant 0 : index
    %c0_4 = arith.constant 0 : index
    %11 = vector.load %arg3[%c0_3, %c0_4] : memref<16x128xf32, #tpu.memory_space<vmem>>, vector<16x128xf32>
    %cst = arith.constant dense<0.000000e+00> : vector<8x16xf32>
    %12 = tpu.matmul %8, %11, %cst {dimension_numbers = #tpu.dot_dimension_numbers<[1], [1], [0], [0], [0, 0, 1, 0], [], []>} : vector<8x128xf32>, vector<16x128xf32>, vector<8x16xf32> -> vector<8x16xf32>
    %c0_5 = arith.constant 0 : index
    %c0_6 = arith.constant 0 : index
    %13 = vector.load %arg2[%c0_5, %c0_6] : memref<16x128xf32, #tpu.memory_space<vmem>>, vector<16x128xf32>
    %cst_7 = arith.constant dense<0.000000e+00> : vector<8x16xf32>
    %14 = tpu.matmul %10, %13, %cst_7 {dimension_numbers = #tpu.dot_dimension_numbers<[1], [1], [0], [0], [0, 0, 1, 0], [], []>} : vector<8x128xf32>, vector<16x128xf32>, vector<8x16xf32> -> vector<8x16xf32>
    %cst_8 = arith.constant dense<0xFF800000> : vector<8xf32>
    %15 = vector.multi_reduction <maximumf>, %12, %cst_8 [1] : vector<8x16xf32> to vector<8xf32>
    %16 = vector.shape_cast %15 : vector<8xf32> to vector<8x1xf32>
    %17 = vector.broadcast %16 : vector<8x1xf32> to vector<8x16xf32>
    %18 = arith.subf %12, %17 : vector<8x16xf32>
    %19 = math.exp %18 : vector<8x16xf32>
    %cst_9 = arith.constant dense<0.000000e+00> : vector<8xf32>
    %20 = vector.multi_reduction <add>, %19, %cst_9 [1] : vector<8x16xf32> to vector<8xf32>
    %21 = vector.shape_cast %20 : vector<8xf32> to vector<8x1xf32>
    %22 = math.log %21 : vector<8x1xf32>
    %23 = arith.addf %22, %16 : vector<8x1xf32>
    %cst_10 = arith.constant dense<0xFF800000> : vector<8xf32>
    %24 = vector.multi_reduction <maximumf>, %14, %cst_10 [1] : vector<8x16xf32> to vector<8xf32>
    %25 = vector.shape_cast %24 : vector<8xf32> to vector<8x1xf32>
    %26 = vector.broadcast %25 : vector<8x1xf32> to vector<8x16xf32>
    %27 = arith.subf %14, %26 : vector<8x16xf32>
    %28 = math.exp %27 : vector<8x16xf32>
    %cst_11 = arith.constant dense<0.000000e+00> : vector<8xf32>
    %29 = vector.multi_reduction <add>, %28, %cst_11 [1] : vector<8x16xf32> to vector<8xf32>
    %30 = vector.shape_cast %29 : vector<8xf32> to vector<8x1xf32>
    %31 = math.log %30 : vector<8x1xf32>
    %32 = arith.addf %31, %25 : vector<8x1xf32>
    %33 = arith.mulf %4, %6 : vector<8x128xf32>
    %cst_12 = arith.constant dense<0.000000e+00> : vector<8xf32>
    %34 = vector.multi_reduction <add>, %33, %cst_12 [1] : vector<8x128xf32> to vector<8xf32>
    %35 = vector.shape_cast %34 : vector<8xf32> to vector<8x1xf32>
    %36 = vector.broadcast %0 : f32 to vector<8x1xf32>
    %37 = arith.mulf %36, %35 : vector<8x1xf32>
    %38 = arith.addf %23, %32 : vector<8x1xf32>
    %cst_13 = arith.constant 2.000000e+00 : f32
    %39 = vector.broadcast %cst_13 : f32 to vector<8x1xf32>
    %40 = arith.mulf %39, %37 : vector<8x1xf32>
    %41 = arith.subf %38, %40 : vector<8x1xf32>
    %c0_14 = arith.constant 0 : index
    %c0_15 = arith.constant 0 : index
    %42 = vector.load %arg4[%c0_14, %c0_15] : memref<8x1xf32, #tpu.memory_space<vmem>>, vector<8x1xf32>
    tpu.vector_store %arg4[%c0_14, %c0_15], %41 {strides = array<i32>} : memref<8x1xf32, #tpu.memory_space<vmem>>, vector<8x1xf32>,
    return
  }
  func.func @transform_0(%arg0: i32) -> (i32, i32) {
    %c0_i32 = arith.constant 0 : i32
    %c0_i32_0 = arith.constant 0 : i32
    %c0_i32_1 = arith.constant 0 : i32
    return %c0_i32, %c0_i32_0 : i32, i32
  }
  func.func @transform_1(%arg0: i32) -> (i32, i32) {
    %c0_i32 = arith.constant 0 : i32
    %c0_i32_0 = arith.constant 0 : i32
    %c0_i32_1 = arith.constant 0 : i32
    return %c0_i32, %c0_i32_0 : i32, i32
  }
  func.func @transform_2(%arg0: i32) -> (i32, i32) {
    %c0_i32 = arith.constant 0 : i32
    %c0_i32_0 = arith.constant 0 : i32
    %c0_i32_1 = arith.constant 0 : i32
    return %c0_i32, %c0_i32_0 : i32, i32
  }
  func.func @transform_3(%arg0: i32) -> (i32, i32) {
    %c0_i32 = arith.constant 0 : i32
    %c0_i32_0 = arith.constant 0 : i32
    return %arg0, %c0_i32 : i32, i32
  }
}

</mosaic_0001>

<llo_original>
// kernel: clip_loss.1
$region0: #{clip_loss.1}
  #allocation0 [shape = 'u32[]', space=smem, size = 0x4, offset = 0x4, fixed_abs, tag = 'smem constant byte address 0x4 - core index']
  #allocation1 [shape = 'u32[144,128]{1,0:T(1,128)}', space=vmem, size = 0x12000, scoped, tag = 'internal scratch']
  #allocation2 [shape = 'f32[1,1]{1,0:T(1,128)S(6)}', space=smem, size = 0x200, scoped, tag = 'scoped memory for clip_loss.1']
  %s0 = inlined_call_operand.<no memory space> [shape: f32[1,1], index: 0, kind: input, shape index: {}]
  %s1 = inlined_call_operand.hbm [shape: f32[16,128], index: 1, kind: input, shape index: {}]
  %s2 = inlined_call_operand.hbm [shape: f32[16,128], index: 2, kind: input, shape index: {}]
  %s3 = inlined_call_operand.vmem [shape: f32[16,1], index: 3, kind: output, shape index: {}]
  %s4 = sld [smem:[#allocation0]]
  $region53: #{clip_loss.1} parent=0
    _
  %s6 = ssub.s32 1, %s4
  %s7 = scalar_select 0, %s6, %s4
  %8 = sst [smem:[#allocation2]] %s0
  $region1: #{clip_loss.1} parent=0
    #allocation3 [shape = 'u8[8192]{0}', space=vmem, size = 0x2000, scoped, tag = 'input window, operand 1, single buffered']
    #allocation4 [shape = 's32[2]{0}', space=sflag, size = 0x8, scoped, tag = 'scoped memory for clip_loss.1']
    #allocation5 [shape = 'u8[8192]{0}', space=vmem, size = 0x2000, scoped, tag = 'input window, operand 2, single buffered']
    #allocation6 [shape = 's32[1]{0}', space=sflag, size = 0x4, scoped, tag = 'scoped memory for clip_loss.1']
    %9 = vsyncpa [#allocation4], 0
    %10 = vsyncpa [#allocation6], 0
    loop: start=0, step=1, limit=4
    $region2: #{clip_loss.1} parent=1 // loop_pre_header
      _
    $region3: #{clip_loss.1} parent=1 // loop_header
      %s12 = sphi 0, %s16
      %p13 = scmp.ge.s32.totalorder %s12, 4
      %s20 = sphi 0, %s20
      %s22 = sphi 0, %s20
      %s23 = sphi 0, %s22
      %s37 = sphi 0, %s23
      %s41 = sphi 0, %s41
      %s43 = sphi 0, %s41
      %s44 = sphi 0, %s43
      %s58 = sphi 0, %s44
      %s62 = sphi 0, %s62
      %s64 = sphi 0, %s62
      %s65 = sphi 0, %s64
      %s79 = sphi 0, %s65
      %s85 = sphi 0, %s87
      %s88 = sphi 0, %s85
      %s89 = sphi 0, %s88
      %s105 = sphi 0, %s89
    $region4: #{clip_loss.1} parent=1 // loop_header_branch
      %15 = sbr.rel (%p13) target = $region8
    $region5: #{clip_loss.1} parent=1 // loop_body
      %s17 = ssub.s32 %s12, 1
      %s18 = ssub.s32 %s12, 2
      %s19 = sadd.s32 %s12, 1
      %s21 = sadd.s32 %s20, 1
      %p24 = scmp.eq.s32.totalorder %s12, 1
      %p25 = scmp.ne.s32.totalorder %s20, %s22
      %p26 = scmp.eq.s32.totalorder %s12, 0
      %p27 = por %p25, %p26
      %p28 = scmp.ne.s32.totalorder %s20, %s22
      %p29 = scmp.eq.s32.totalorder %s17, 1
      %p30 = por %p28, %p29
      %p31 = scmp.ne.s32.totalorder %s22, %s23
      %p32 = scmp.eq.s32.totalorder %s17, 0
      %p33 = por %p31, %p32
      %p34 = scmp.ne.s32.totalorder %s22, %s23
      %p35 = scmp.eq.s32.totalorder %s18, 1
      %p36 = por %p34, %p35
      %p38 = scmp.ne.s32.totalorder %s23, %s37
      %p39 = scmp.eq.s32.totalorder %s18, 0
      %p40 = por %p38, %p39
      %s42 = sadd.s32 %s41, 1
      %p45 = scmp.eq.s32.totalorder %s12, 1
      %p46 = scmp.ne.s32.totalorder %s41, %s43
      %p47 = scmp.eq.s32.totalorder %s12, 0
      %p48 = por %p46, %p47
      %p49 = scmp.ne.s32.totalorder %s41, %s43
      %p50 = scmp.eq.s32.totalorder %s17, 1
      %p51 = por %p49, %p50
      %p52 = scmp.ne.s32.totalorder %s43, %s44
      %p53 = scmp.eq.s32.totalorder %s17, 0
      %p54 = por %p52, %p53
      %p55 = scmp.ne.s32.totalorder %s43, %s44
      %p56 = scmp.eq.s32.totalorder %s18, 1
      %p57 = por %p55, %p56
      %p59 = scmp.ne.s32.totalorder %s44, %s58
      %p60 = scmp.eq.s32.totalorder %s18, 0
      %p61 = por %p59, %p60
      %s63 = sadd.s32 %s62, 1
      %p66 = scmp.eq.s32.totalorder %s12, 1
      %p67 = scmp.ne.s32.totalorder %s62, %s64
      %p68 = scmp.eq.s32.totalorder %s12, 0
      %p69 = por %p67, %p68
      %p70 = scmp.ne.s32.totalorder %s62, %s64
      %p71 = scmp.eq.s32.totalorder %s17, 1
      %p72 = por %p70, %p71
      %p73 = scmp.ne.s32.totalorder %s64, %s65
      %p74 = scmp.eq.s32.totalorder %s17, 0
      %p75 = por %p73, %p74
      %p76 = scmp.ne.s32.totalorder %s64, %s65
      %p77 = scmp.eq.s32.totalorder %s18, 1
      %p78 = por %p76, %p77
      %p80 = scmp.ne.s32.totalorder %s65, %s79
      %p81 = scmp.eq.s32.totalorder %s18, 0
      %p82 = por %p80, %p81
      %s83 = ssub.s32 %s12, %s19
      %p84 = scmp.eq.s32.totalorder %s83, 0
      %s86 = sadd.s32 %s85, 1
      %s87 = scalar_select %p84, %s85, %s86
      %p90 = pneg %p84
      %p91 = scmp.eq.s32.totalorder %s12, 1
      %p92 = por %p90, %p91
      %p93 = scmp.ne.s32.totalorder %s85, %s88
      %p94 = scmp.eq.s32.totalorder %s12, 0
      %p95 = por %p93, %p94
      %p96 = scmp.ne.s32.totalorder %s85, %s88
      %p97 = scmp.eq.s32.totalorder %s17, 1
      %p98 = por %p96, %p97
      %p99 = scmp.ne.s32.totalorder %s88, %s89
      %p100 = scmp.eq.s32.totalorder %s17, 0
      %p101 = por %p99, %p100
      %p102 = scmp.ne.s32.totalorder %s88, %s89
      %p103 = scmp.eq.s32.totalorder %s18, 1
      %p104 = por %p102, %p103
      %p106 = scmp.ne.s32.totalorder %s89, %s105
      %p107 = scmp.eq.s32.totalorder %s18, 0
      %p108 = por %p106, %p107
      %p109 = scmp.le.s32.totalorder 1, %s12
      %p110 = scmp.lt.s32.totalorder %s12, 3
      %p111 = pnand %p109, %p110
      %p112 = pneg %p111
      // Predicated region
      $region9: #{clip_loss.1} parent=5 // pred_check
        _
      $region10: #{clip_loss.1} parent=5 // pred_check_branch
        %114 = sbr.rel (%p111) target = $region12
      $region11: #{clip_loss.1} parent=5 // pred_region
        %s115 = ssub.s32 %s12, 1
        // Predicated region
        $region13: #{clip_loss.1} parent=11 // pred_check
          %p116 = pneg %p33
        $region14: #{clip_loss.1} parent=11 // pred_check_branch
          %118 = sbr.rel (%p116) target = $region16
        $region15: #{clip_loss.1} parent=11 // pred_region
          _
        $region16: #{clip_loss.1} parent=11 // pred_fallthru
          _
        // Predicated region
        $region17: #{clip_loss.1} parent=11 // pred_check
          %p119 = pneg %p54
        $region18: #{clip_loss.1} parent=11 // pred_check_branch
          %121 = sbr.rel (%p119) target = $region20
        $region19: #{clip_loss.1} parent=11 // pred_region
          %s123 = ssub.s32 256, 256
          %124 = vsyncadd [#allocation4], %s123
          %s125 = sshll.u32 [#allocation3], 4
          %s126 = int_to_ptr.vmem [resolvable:$true] %s125
          %131 = dma.hbm_to_vmem [thread:$0]  %s1, 256, %s126, [#allocation4], 128, 128, 8
        $region20: #{clip_loss.1} parent=11 // pred_fallthru
          _
        // Predicated region
        $region21: #{clip_loss.1} parent=11 // pred_check
          %p132 = pneg %p75
        $region22: #{clip_loss.1} parent=11 // pred_check_branch
          %134 = sbr.rel (%p132) target = $region24
        $region23: #{clip_loss.1} parent=11 // pred_region
          %s136 = ssub.s32 256, 256
          %137 = vsyncadd [#allocation6], %s136
          %s138 = sshll.u32 [#allocation5], 4
          %s139 = int_to_ptr.vmem [resolvable:$true] %s138
          %144 = dma.hbm_to_vmem [thread:$0]  %s2, 256, %s139, [#allocation6], 128, 128, 8
        $region24: #{clip_loss.1} parent=11 // pred_fallthru
          _
      $region12: #{clip_loss.1} parent=5 // pred_fallthru
        _
      %p145 = scmp.lt.s32.totalorder %s12, 2
      // Predicated region
      $region25: #{clip_loss.1} parent=5 // pred_check
        %p146 = pneg %p145
      $region26: #{clip_loss.1} parent=5 // pred_check_branch
        %148 = sbr.rel (%p146) target = $region28
      $region27: #{clip_loss.1} parent=5 // pred_region
        _
      $region28: #{clip_loss.1} parent=5 // pred_fallthru
        _
      %p149 = scmp.le.s32.totalorder 1, %s12
      %p150 = scmp.lt.s32.totalorder %s12, 3
      %p151 = pnand %p149, %p150
      %p152 = pneg %p151
      // Predicated region
      $region29: #{clip_loss.1} parent=5 // pred_check
        _
      $region30: #{clip_loss.1} parent=5 // pred_check_branch
        %154 = sbr.rel (%p151) target = $region32
      $region31: #{clip_loss.1} parent=5 // pred_region
        %s155 = ssub.s32 %s12, 1
        // Predicated region
        $region33: #{clip_loss.1} parent=31 // pred_check
          %p156 = pneg %p54
        $region34: #{clip_loss.1} parent=31 // pred_check_branch
          %158 = sbr.rel (%p156) target = $region36
        $region35: #{clip_loss.1} parent=31 // pred_region
          %159 = dma.done [#allocation4], 256
        $region36: #{clip_loss.1} parent=31 // pred_fallthru
          _
        // Predicated region
        $region37: #{clip_loss.1} parent=31 // pred_check
          %p160 = pneg %p75
        $region38: #{clip_loss.1} parent=31 // pred_check_branch
          %162 = sbr.rel (%p160) target = $region40
        $region39: #{clip_loss.1} parent=31 // pred_region
          %163 = dma.done [#allocation6], 256
        $region40: #{clip_loss.1} parent=31 // pred_fallthru
          _
        %p164 = pneg %p33
        %p165 = pneg %p30
        %p166 = pneg %p54
        %p167 = pneg %p51
        %p168 = pneg %p75
        %p169 = pneg %p72
        %p170 = pneg %p101
        %p171 = pneg %p98
        %p172 = scmp.lt.s32.totalorder %s17, 1
        %s173 = scalar_select %p172, %s17, 1
        %s174 = smul.addr %s173, 8
        %s175 = scalar_lea.vmem %s3, %s174
        %p176 = scmp.lt.s32.totalorder %s17, 1
        %s177 = scalar_select %p176, %s17, 1
        %s178 = smul.addr %s177, 8
        %s179 = scalar_lea.vmem %s3, %s178
        %s180 = sld [smem:[#allocation2]]
        %s181 = smul.u32 %s17, 8
        %s182 = scalar_lea.vmem [#allocation3], %s181
        %v183 = vld [vmem:[%s182] sm:$0xff]
        %s184 = scalar_lea.vmem [#allocation5], %s181
        %v185 = vld [vmem:[%s184] sm:$0xff]
        %v186 = vstv %s180
        %v187 = vmul.f32 %v183, %v186
        %v188 = vmul.f32 %v185, %v186
        %v189 = vld [vmem:[#allocation5] sm:$0xff]
        %v190 = vld [vmem:[#allocation5 + $0x8] sm:$0xff]
        %191 = vmatprep.subr.mxu0 0.0
        %192 = vmatpush1.xpose.msra.mxu0 0.0
        %193 = vmatprep.subr.mxu0 0.0
        %194 = vmatpush1.xpose.msra.mxu0 0.0
        %195 = vmatprep.subr.mxu0 0.0
        %196 = vmatpush1.xpose.msra.mxu0 0.0
        %197 = vmatprep.subr.mxu0 0.0
        %198 = vmatpush1.xpose.msra.mxu0 0.0
        %199 = vmatprep.subr.mxu0 0.0
        %200 = vmatpush1.xpose.msra.mxu0 0.0
        %201 = vmatprep.subr.mxu0 0.0
        %202 = vmatpush1.xpose.msra.mxu0 0.0
        %203 = vmatprep.subr.mxu0 0.0
        %204 = vmatpush1.xpose.msra.mxu0 0.0
        %205 = vmatprep.subr.mxu0 0.0
        %206 = vmatpush1.xpose.msra.mxu0 0.0
        %207 = vmatprep.subr.mxu0 0.0
        %208 = vmatpush1.xpose.msra.mxu0 0.0
        %209 = vmatprep.subr.mxu0 0.0
        %210 = vmatpush1.xpose.msra.mxu0 0.0
        %211 = vmatprep.subr.mxu0 0.0
        %212 = vmatpush1.xpose.msra.mxu0 0.0
        %213 = vmatprep.subr.mxu0 0.0
        %214 = vmatpush1.xpose.msra.mxu0 0.0
        %215 = vmatprep.subr.mxu0 0.0
        %216 = vmatpush1.xpose.msra.mxu0 0.0
        %217 = vmatprep.subr.mxu0 0.0
        %218 = vmatpush1.xpose.msra.mxu0 0.0
        %219 = vmatprep.subr.mxu0 0.0
        %220 = vmatpush1.xpose.msra.mxu0 %v190
        %221 = vmatprep.subr.mxu0 0.0
        %222 = vmatpush1.xpose.msra.mxu0 %v189
        %223 = vmatprep.subr.mxu0 0.0
        %224 = vmatpush2.xpose.msra.mxu0 0.0
        %225 = vmatprep.subr.mxu0 0.0
        %226 = vmatpush2.xpose.msra.mxu0 0.0
        %227 = vmatprep.subr.mxu0 0.0
        %228 = vmatpush2.xpose.msra.mxu0 0.0
        %229 = vmatprep.subr.mxu0 0.0
        %230 = vmatpush2.xpose.msra.mxu0 0.0
        %231 = vmatprep.subr.mxu0 0.0
        %232 = vmatpush2.xpose.msra.mxu0 0.0
        %233 = vmatprep.subr.mxu0 0.0
        %234 = vmatpush2.xpose.msra.mxu0 0.0
        %235 = vmatprep.subr.mxu0 0.0
        %236 = vmatpush2.xpose.msra.mxu0 0.0
        %237 = vmatprep.subr.mxu0 0.0
        %238 = vmatpush2.xpose.msra.mxu0 0.0
        %239 = vmatprep.subr.mxu0 0.0
        %240 = vmatpush2.xpose.msra.mxu0 0.0
        %241 = vmatprep.subr.mxu0 0.0
        %242 = vmatpush2.xpose.msra.mxu0 0.0
        %243 = vmatprep.subr.mxu0 0.0
        %244 = vmatpush2.xpose.msra.mxu0 0.0
        %245 = vmatprep.subr.mxu0 0.0
        %246 = vmatpush2.xpose.msra.mxu0 0.0
        %247 = vmatprep.subr.mxu0 0.0
        %248 = vmatpush2.xpose.msra.mxu0 0.0
        %249 = vmatprep.subr.mxu0 0.0
        %250 = vmatpush2.xpose.msra.mxu0 0.0
        %251 = vmatprep.subr.mxu0 0.0
        %252 = vmatpush2.xpose.msra.mxu0 0.0
        %253 = vmatprep.subr.mxu0 0.0
        %254 = vmatpush2.xpose.msra.mxu0 0.0
        %255 = vmatprep.mubr.f32.mxu0 0.0
        %256 = vmatmul.mubr.f32.gmra.mxu0 %v187
        %v257 = vpop.f32.mrf.mxu0
        %v258 = vadd.f32 0.0, %v257
        %v259 = vpop.f32.mrf.mxu0
        %260 = vdwg.mxu0
        %v261 = vld [vmem:[#allocation3] sm:$0xff]
        %v262 = vld [vmem:[#allocation3 + $0x8] sm:$0xff]
        %263 = vmatprep.subr.mxu0 0.0
        %264 = vmatpush1.xpose.msra.mxu0 0.0
        %265 = vmatprep.subr.mxu0 0.0
        %266 = vmatpush1.xpose.msra.mxu0 0.0
        %267 = vmatprep.subr.mxu0 0.0
        %268 = vmatpush1.xpose.msra.mxu0 0.0
        %269 = vmatprep.subr.mxu0 0.0
        %270 = vmatpush1.xpose.msra.mxu0 0.0
        %271 = vmatprep.subr.mxu0 0.0
        %272 = vmatpush1.xpose.msra.mxu0 0.0
        %273 = vmatprep.subr.mxu0 0.0
        %274 = vmatpush1.xpose.msra.mxu0 0.0
        %275 = vmatprep.subr.mxu0 0.0
        %276 = vmatpush1.xpose.msra.mxu0 0.0
        %277 = vmatprep.subr.mxu0 0.0
        %278 = vmatpush1.xpose.msra.mxu0 0.0
        %279 = vmatprep.subr.mxu0 0.0
        %280 = vmatpush1.xpose.msra.mxu0 0.0
        %281 = vmatprep.subr.mxu0 0.0
        %282 = vmatpush1.xpose.msra.mxu0 0.0
        %283 = vmatprep.subr.mxu0 0.0
        %284 = vmatpush1.xpose.msra.mxu0 0.0
        %285 = vmatprep.subr.mxu0 0.0
        %286 = vmatpush1.xpose.msra.mxu0 0.0
        %287 = vmatprep.subr.mxu0 0.0
        %288 = vmatpush1.xpose.msra.mxu0 0.0
        %289 = vmatprep.subr.mxu0 0.0
        %290 = vmatpush1.xpose.msra.mxu0 0.0
        %291 = vmatprep.subr.mxu0 0.0
        %292 = vmatpush1.xpose.msra.mxu0 %v262
        %293 = vmatprep.subr.mxu0 0.0
        %294 = vmatpush1.xpose.msra.mxu0 %v261
        %295 = vmatprep.subr.mxu0 0.0
        %296 = vmatpush2.xpose.msra.mxu0 0.0
        %297 = vmatprep.subr.mxu0 0.0
        %298 = vmatpush2.xpose.msra.mxu0 0.0
        %299 = vmatprep.subr.mxu0 0.0
        %300 = vmatpush2.xpose.msra.mxu0 0.0
        %301 = vmatprep.subr.mxu0 0.0
        %302 = vmatpush2.xpose.msra.mxu0 0.0
        %303 = vmatprep.subr.mxu0 0.0
        %304 = vmatpush2.xpose.msra.mxu0 0.0
        %305 = vmatprep.subr.mxu0 0.0
        %306 = vmatpush2.xpose.msra.mxu0 0.0
        %307 = vmatprep.subr.mxu0 0.0
        %308 = vmatpush2.xpose.msra.mxu0 0.0
        %309 = vmatprep.subr.mxu0 0.0
        %310 = vmatpush2.xpose.msra.mxu0 0.0
        %311 = vmatprep.subr.mxu0 0.0
        %312 = vmatpush2.xpose.msra.mxu0 0.0
        %313 = vmatprep.subr.mxu0 0.0
        %314 = vmatpush2.xpose.msra.mxu0 0.0
        %315 = vmatprep.subr.mxu0 0.0
        %316 = vmatpush2.xpose.msra.mxu0 0.0
        %317 = vmatprep.subr.mxu0 0.0
        %318 = vmatpush2.xpose.msra.mxu0 0.0
        %319 = vmatprep.subr.mxu0 0.0
        %320 = vmatpush2.xpose.msra.mxu0 0.0
        %321 = vmatprep.subr.mxu0 0.0
        %322 = vmatpush2.xpose.msra.mxu0 0.0
        %323 = vmatprep.subr.mxu0 0.0
        %324 = vmatpush2.xpose.msra.mxu0 0.0
        %325 = vmatprep.subr.mxu0 0.0
        %326 = vmatpush2.xpose.msra.mxu0 0.0
        %327 = vmatprep.mubr.f32.mxu0 0.0
        %328 = vmatmul.mubr.f32.gmra.mxu0 %v188
        %v329 = vpop.f32.mrf.mxu0
        %v330 = vadd.f32 0.0, %v329
        %v331 = vpop.f32.mrf.mxu0
        %332 = vdwg.mxu0
        %vm333 = vcmask 130048
        %v334 = vsel %vm333, %v258, -inf
        %335 = vmax.xlane.f32.xlu0 %v334
        %v336 = vpop.xlane.xlu0 %335
        %v337 = vsub.f32 %v258, %v336
        %v338 = vmul.f32 %v337, 1.442695
        %v339 = vpow.pop %v338
        %v340 = vsel %vm333, %v339, 0.0
        %341 = vadd.xlane.f32.xlu0 %v340
        %v342 = vpop.xlane.xlu0 %341
        %v343 = vlog2.pop %v342
        %v344 = vmul.f32 %v343, 0.6931472
        %v345 = vadd.f32 %v344, %v336
        %v346 = vsel %vm333, %v330, -inf
        %347 = vmax.xlane.f32.xlu0 %v346
        %v348 = vpop.xlane.xlu0 %347
        %v349 = vsub.f32 %v330, %v348
        %v350 = vmul.f32 %v349, 1.442695
        %v351 = vpow.pop %v350
        %v352 = vsel %vm333, %v351, 0.0
        %353 = vadd.xlane.f32.xlu0 %v352
        %v354 = vpop.xlane.xlu0 %353
        %v355 = vlog2.pop %v354
        %v356 = vmul.f32 %v355, 0.6931472
        %v357 = vadd.f32 %v356, %v348
        %v358 = vmul.f32 %v183, %v185
        %359 = vadd.xlane.f32.xlu0 %v358
        %v360 = vpop.xlane.xlu0 %359
        %v361 = vmul.f32 %v186, %v360
        %v362 = vadd.f32 %v345, %v357
        %v363 = vmul.f32 %v361, 2.0
        %v364 = vsub.f32 %v362, %v363
        %vm365 = vcmask 7168
        %366 = vst.msk [vmem:[%s179] sm:$0xff] %vm365, %v364
        %p367 = scmp.lt.s32.totalorder %s17, 1
        %s368 = scalar_select %p367, %s17, 1
        %s369 = smul.addr %s368, 8
        %s370 = scalar_lea.vmem %s3, %s369
        // Predicated region
        $region41: #{clip_loss.1} parent=31 // pred_check
          %p371 = pneg %p98
        $region42: #{clip_loss.1} parent=31 // pred_check_branch
          %373 = sbr.rel (%p371) target = $region44
        $region43: #{clip_loss.1} parent=31 // pred_region
          _
        $region44: #{clip_loss.1} parent=31 // pred_fallthru
          _
      $region32: #{clip_loss.1} parent=5 // pred_fallthru
        _
      %p374 = scmp.le.s32.totalorder 2, %s12
      // Predicated region
      $region45: #{clip_loss.1} parent=5 // pred_check
        %p375 = pneg %p374
      $region46: #{clip_loss.1} parent=5 // pred_check_branch
        %377 = sbr.rel (%p375) target = $region48
      $region47: #{clip_loss.1} parent=5 // pred_region
        %s378 = ssub.s32 %s12, 2
        // Predicated region
        $region49: #{clip_loss.1} parent=47 // pred_check
          %p379 = pneg %p104
        $region50: #{clip_loss.1} parent=47 // pred_check_branch
          %381 = sbr.rel (%p379) target = $region52
        $region51: #{clip_loss.1} parent=47 // pred_region
          %p382 = scmp.lt.s32.totalorder %s18, 1
          %s383 = scalar_select %p382, %s18, 1
          %s384 = smul.addr %s383, 8
          %s385 = scalar_lea.vmem %s3, %s384
        $region52: #{clip_loss.1} parent=47 // pred_fallthru
          _
      $region48: #{clip_loss.1} parent=5 // pred_fallthru
        _
    $region6: #{clip_loss.1} parent=1 // loop_footer
      %s16 = sadd.s32 1, %s12
    $region7: #{clip_loss.1} parent=1 // loop_footer_branch
      %11 = sbr.rel target = $region3
    $region8: #{clip_loss.1} parent=1 // loop_exit
      _
    %386 = vsyncpa [#allocation4], 1
    %s387 = scalar_lea.sflag [#allocation4], 1
    %388 = vsyncpa %s387, 1
    %389 = vsyncpa [#allocation6], 1

</llo_original>
